<compile_context>
chip_gen: v7x
topology: tpu7x:2x2x1
jax: 0.10.0
libtpu: 0.0.40
codegen_flags: <defaults>
</compile_context>

<pallas_src>
import functools

import jax
import jax.numpy as jnp
from jax import lax
from jax.experimental import pallas as pl
from jax.experimental.pallas import tpu as pltpu


def _rnn_block_kernel(x_ref, h0_ref, w_ref, hseq_ref, aseq_ref, h_scr,
                      *, block_t, activation):
    """One grid step == `block_t` RNN timesteps for one batch block.

    h_scr (f32 VMEM) carries the hidden state across the time grid axis."""
    t_blk = pl.program_id(1)

    @pl.when(t_blk == 0)
    def _():
        h_scr[...] = h0_ref[...].astype(jnp.float32)

    w = w_ref[...]                       # VMEM-resident weights (f32 or bf16)

    def step(i, h):
        # a = h @ W + x_pad : MXU matmul (f32 accumulate) + full-vreg add.
        a = jnp.dot(h.astype(w.dtype), w,
                    preferred_element_type=jnp.float32)
        a = a + x_ref[i].astype(jnp.float32)
        aseq_ref[i] = a.astype(aseq_ref.dtype)      # preactivation output
        h_new = activation(a)
        hseq_ref[i] = h_new.astype(hseq_ref.dtype)  # hidden-state output
        return h_new                                 # carry stays in vregs

    h_final = lax.fori_loop(0, block_t, step, h_scr[...], unroll=True)
    h_scr[...] = h_final                 # single scratch write per grid step


def rnn_rollout(xs, W, state=None, activation=jnp.tanh,
                block_t=8, block_b=None):
    """Run the RNN over a whole sequence in a single pallas_call.

    xs: (T, B, input_size), W: (H, H).  Pass W as bf16 for the bf16 MXU path.
    Returns (h_seq (T,B,H), a_seq (T,B,H))."""
    T, B, I = xs.shape
    H = W.shape[0]
    assert W.shape == (H, H)
    assert I <= H

    out_dtype = xs.dtype
    if state is None:
        state = jnp.zeros((B, H), dtype=out_dtype)   # init_state

    # Lane-dense x: pre-pad the feature axis to H so the in-kernel add is a
    # full-vreg op and the x DMA rows are contiguous (no masked lanes).
    xs_p = jnp.pad(xs, ((0, 0), (0, 0), (0, H - I))) if I < H else xs

    # Time blocking: largest divisor of T that is <= requested block_t.
    block_t = max(1, min(block_t, T))
    while T % block_t:
        block_t -= 1

    # Batch blocking (megacore split on v7x).  Sublane rule: block_b must be a
    # multiple of 8 or equal to the full batch.
    if block_b is None:
        block_b = B
    block_b = min(block_b, B)
    if B % block_b or (block_b != B and block_b % 8 != 0):
        block_b = B

    grid = (B // block_b, T // block_t)

    kernel = functools.partial(_rnn_block_kernel,
                               block_t=block_t, activation=activation)

    itemsize = jnp.dtype(out_dtype).itemsize
    w_bytes = W.size * W.dtype.itemsize
    cost = pl.CostEstimate(
        flops=2 * T * B * H * H,
        transcendentals=T * B * H,
        bytes_accessed=(xs_p.size * xs_p.dtype.itemsize + w_bytes
                        + state.size * state.dtype.itemsize
                        + 2 * T * B * H * itemsize),
    )

    # Raise the scoped-VMEM limit only when the resident W + stream buffers
    # exceed the 32 MiB default (irrelevant at small H).
    stream_bytes = block_t * block_b * H * (xs_p.dtype.itemsize + 2 * itemsize)
    vmem_need = (2 * w_bytes + 2 * stream_bytes
                 + 2 * block_b * H * state.dtype.itemsize
                 + 4 * block_b * H)
    cp_kwargs = dict(dimension_semantics=("parallel", "arbitrary"))
    if vmem_need > (32 << 20):
        cp_kwargs["vmem_limit_bytes"] = min(int(vmem_need * 5 // 4), 120 << 20)

    h_seq, a_seq = pl.pallas_call(
        kernel,
        out_shape=(
            jax.ShapeDtypeStruct((T, B, H), out_dtype),   # hidden states
            jax.ShapeDtypeStruct((T, B, H), out_dtype),   # preactivations
        ),
        grid=grid,
        in_specs=[
            pl.BlockSpec((block_t, block_b, H), lambda b, t: (t, b, 0)),  # x
            pl.BlockSpec((block_b, H), lambda b, t: (b, 0)),              # h0
            pl.BlockSpec((H, H), lambda b, t: (0, 0)),                    # W
        ],
        out_specs=(
            pl.BlockSpec((block_t, block_b, H), lambda b, t: (t, b, 0)),
            pl.BlockSpec((block_t, block_b, H), lambda b, t: (t, b, 0)),
        ),
        scratch_shapes=[pltpu.VMEM((block_b, H), jnp.float32)],   # carried h
        compiler_params=pltpu.CompilerParams(**cp_kwargs),
        cost_estimate=cost,
    )(xs_p, state, W)

    return h_seq, a_seq


def rnn_forward(x, W, state=None, activation=jnp.tanh):
    """Pallas equivalent of Network.forward (single step). Returns (h_new, [a])."""
    h_seq, a_seq = rnn_rollout(x[None], W, state=state, activation=activation,
                               block_t=1)
    return h_seq[0], [a_seq[0]]


def init_params(key, hidden_size):
    # Synthetic stand-in for the module's `weights_init(hidden_size, hidden_size)`.
    return (jax.random.normal(key, (hidden_size, hidden_size), dtype=jnp.float32)
            / jnp.sqrt(hidden_size).astype(jnp.float32))


if __name__ == "__main__":
    key = jax.random.PRNGKey(0)
    k_x, k_w, k_h, k_s = jax.random.split(key, 4)

    batch = 16            # small demo; production should use B >= 128/256
    input_size = 16
    hidden_size = 128     # lane-dense last dim (multiple of 128)
    seq_len = 16

    W = init_params(k_w, hidden_size)
    W_bf16 = W.astype(jnp.bfloat16)
    x = jax.random.normal(k_x, (batch, input_size), dtype=jnp.float32)
    h0 = jax.random.normal(k_h, (batch, hidden_size), dtype=jnp.float32)
    xs = jax.random.normal(k_s, (seq_len, batch, input_size), dtype=jnp.float32)

    # --- single step (matches Network.forward) -----------------------------
    h_new, (a,) = rnn_forward(x, W, state=None)      # zero init_state
    h_new2, (a2,) = rnn_forward(x, W, state=h0)      # explicit state

    # --- fused rollout: ONE pallas_call, time blocked, batch "parallel" ----
    h_seq, a_seq = rnn_rollout(xs, W, state=h0, block_t=8, block_b=8)

    # --- bf16-MXU variant (recommended for v6e/v7x) -------------------------
    h_seq_bf, a_seq_bf = rnn_rollout(xs, W_bf16, state=h0, block_t=8, block_b=8)

    jax.block_until_ready((h_new, a, h_new2, a2, h_seq, a_seq, h_seq_bf, a_seq_bf))

    # ---------------- correctness vs plain-JAX reference -------------------
    def ref_step(h, xin, Wr, cast=None):
        x_pad = jnp.pad(xin, ((0, 0), (0, hidden_size - input_size)))
        if cast is not None:
            a_r = jnp.dot(h.astype(cast), Wr,
                          preferred_element_type=jnp.float32) + x_pad
        else:
            a_r = jnp.dot(h, Wr, precision=jax.lax.Precision.HIGHEST) + x_pad
        return jnp.tanh(a_r), a_r

    h_r0, a_r0 = ref_step(jnp.zeros((batch, hidden_size), jnp.float32), x, W)
    h_r1, a_r1 = ref_step(h0, x, W)
    assert jnp.allclose(a, a_r0, atol=1e-3), "zero-state preactivation mismatch"
    assert jnp.allclose(h_new, h_r0, atol=1e-3), "zero-state hidden mismatch"
    assert jnp.allclose(a2, a_r1, atol=1e-3), "preactivation mismatch"
    assert jnp.allclose(h_new2, h_r1, atol=1e-3), "hidden state mismatch"

    # f32 rollout vs f32 reference
    h_c = h0
    h_refs, a_refs = [], []
    for t in range(seq_len):
        h_c, a_t = ref_step(h_c, xs[t], W)
        h_refs.append(h_c)
        a_refs.append(a_t)
    assert jnp.allclose(h_seq, jnp.stack(h_refs), atol=5e-3), "rollout hidden mismatch"
    assert jnp.allclose(a_seq, jnp.stack(a_refs), atol=5e-3), "rollout preact mismatch"

    # bf16 rollout vs bf16-cast reference (same cast -> tight tolerance)
    h_c = h0
    h_refs_bf, a_refs_bf = [], []
    for t in range(seq_len):
        h_c, a_t = ref_step(h_c, xs[t], W_bf16, cast=jnp.bfloat16)
        h_refs_bf.append(h_c)
        a_refs_bf.append(a_t)
    assert jnp.allclose(h_seq_bf, jnp.stack(h_refs_bf), atol=2e-2), \
        "bf16 rollout hidden mismatch"
    assert jnp.allclose(a_seq_bf, jnp.stack(a_refs_bf), atol=2e-2), \
        "bf16 rollout preact mismatch"

    print("KERNEL_OK")
</pallas_src>

<mosaic_0001>
module attributes {stable_mosaic.version = 11 : i64} {
  func.func @_rnn_block_kernel(%arg0: i32, %arg1: i32, %arg2: memref<1x16x128xf32, #tpu.memory_space<vmem>>, %arg3: memref<16x128xf32, #tpu.memory_space<vmem>>, %arg4: memref<128x128xf32, #tpu.memory_space<vmem>>, %arg5: memref<1x16x128xf32, #tpu.memory_space<vmem>>, %arg6: memref<1x16x128xf32, #tpu.memory_space<vmem>>, %arg7: memref<16x128xf32, #tpu.memory_space<vmem>>) attributes {dimension_semantics = [#tpu.dimension_semantics<parallel>, #tpu.dimension_semantics<arbitrary>], iteration_bounds = array<i64: 1, 1>, scalar_prefetch = 0 : i64, scratch_operands = 1 : i64, tpu.core_type = #tpu.core_type<tc>, window_params = [{transform_indices = @transform_0, window_bounds = array<i64: 1, 16, 128>}, {transform_indices = @transform_1, window_bounds = array<i64: 16, 128>}, {pipeline_mode = #tpu.pipeline_mode<synchronous>, transform_indices = @transform_2, window_bounds = array<i64: 128, 128>}, {transform_indices = @transform_3, window_bounds = array<i64: 1, 16, 128>}, {transform_indices = @transform_4, window_bounds = array<i64: 1, 16, 128>}]} {
    %c0_i32 = arith.constant 0 : i32
    %0 = arith.cmpi eq, %arg1, %c0_i32 : i32
    %1 = arith.extui %0 : i1 to i32
    %c0_i32_0 = arith.constant 0 : i32
    %2 = arith.cmpi ne, %1, %c0_i32_0 : i32
    scf.if %2 {
      %c0_13 = arith.constant 0 : index
      %c0_14 = arith.constant 0 : index
      %20 = vector.load %arg3[%c0_13, %c0_14] : memref<16x128xf32, #tpu.memory_space<vmem>>, vector<16x128xf32>
      %c0_15 = arith.constant 0 : index
      %c0_16 = arith.constant 0 : index
      %21 = vector.load %arg7[%c0_15, %c0_16] : memref<16x128xf32, #tpu.memory_space<vmem>>, vector<16x128xf32>
      tpu.vector_store %arg7[%c0_15, %c0_16], %20 {strides = array<i32>} : memref<16x128xf32, #tpu.memory_space<vmem>>, vector<16x128xf32>,
    } else {
    }
    %c0 = arith.constant 0 : index
    %c0_1 = arith.constant 0 : index
    %3 = vector.load %arg4[%c0, %c0_1] : memref<128x128xf32, #tpu.memory_space<vmem>>, vector<128x128xf32>
    %c0_2 = arith.constant 0 : index
    %c0_3 = arith.constant 0 : index
    %4 = vector.load %arg7[%c0_2, %c0_3] : memref<16x128xf32, #tpu.memory_space<vmem>>, vector<16x128xf32>
    %c0_i32_4 = arith.constant 0 : i32
    %cst = arith.constant dense<0.000000e+00> : vector<16x128xf32>
    %5 = tpu.matmul %4, %3, %cst {dimension_numbers = #tpu.dot_dimension_numbers<[1], [0], [0], [1], [0, 0, 1, 1], [], []>} : vector<16x128xf32>, vector<128x128xf32>, vector<16x128xf32> -> vector<16x128xf32>
    %6 = arith.index_cast %c0_i32_4 : i32 to index
    %c0_5 = arith.constant 0 : index
    %c0_6 = arith.constant 0 : index
    %7 = vector.load %arg2[%6, %c0_5, %c0_6] : memref<1x16x128xf32, #tpu.memory_space<vmem>>, vector<1x16x128xf32>
    %8 = vector.shape_cast %7 : vector<1x16x128xf32> to vector<16x128xf32>
    %9 = arith.addf %5, %8 : vector<16x128xf32>
    %10 = arith.index_cast %c0_i32_4 : i32 to index
    %c0_7 = arith.constant 0 : index
    %c0_8 = arith.constant 0 : index
    %11 = vector.load %arg6[%10, %c0_7, %c0_8] : memref<1x16x128xf32, #tpu.memory_space<vmem>>, vector<1x16x128xf32>
    %12 = vector.shape_cast %11 : vector<1x16x128xf32> to vector<16x128xf32>
    %13 = vector.shape_cast %9 : vector<16x128xf32> to vector<1x16x128xf32>
    tpu.vector_store %arg6[%10, %c0_7, %c0_8], %13 {strides = array<i32>} : memref<1x16x128xf32, #tpu.memory_space<vmem>>, vector<1x16x128xf32>,
    %14 = math.tanh %9 : vector<16x128xf32>
    %15 = arith.index_cast %c0_i32_4 : i32 to index
    %c0_9 = arith.constant 0 : index
    %c0_10 = arith.constant 0 : index
    %16 = vector.load %arg5[%15, %c0_9, %c0_10] : memref<1x16x128xf32, #tpu.memory_space<vmem>>, vector<1x16x128xf32>
    %17 = vector.shape_cast %16 : vector<1x16x128xf32> to vector<16x128xf32>
    %18 = vector.shape_cast %14 : vector<16x128xf32> to vector<1x16x128xf32>
    tpu.vector_store %arg5[%15, %c0_9, %c0_10], %18 {strides = array<i32>} : memref<1x16x128xf32, #tpu.memory_space<vmem>>, vector<1x16x128xf32>,
    %c1_i32 = arith.constant 1 : i32
    %c0_11 = arith.constant 0 : index
    %c0_12 = arith.constant 0 : index
    %19 = vector.load %arg7[%c0_11, %c0_12] : memref<16x128xf32, #tpu.memory_space<vmem>>, vector<16x128xf32>
    tpu.vector_store %arg7[%c0_11, %c0_12], %14 {strides = array<i32>} : memref<16x128xf32, #tpu.memory_space<vmem>>, vector<16x128xf32>,
    return
  }
  func.func @transform_0(%arg0: i32, %arg1: i32) -> (i32, i32, i32) {
    %c0_i32 = arith.constant 0 : i32
    %c0_i32_0 = arith.constant 0 : i32
    return %arg1, %arg0, %c0_i32 : i32, i32, i32
  }
  func.func @transform_1(%arg0: i32, %arg1: i32) -> (i32, i32) {
    %c0_i32 = arith.constant 0 : i32
    %c0_i32_0 = arith.constant 0 : i32
    return %arg0, %c0_i32 : i32, i32
  }
  func.func @transform_2(%arg0: i32, %arg1: i32) -> (i32, i32) {
    %c0_i32 = arith.constant 0 : i32
    %c0_i32_0 = arith.constant 0 : i32
    %c0_i32_1 = arith.constant 0 : i32
    return %c0_i32, %c0_i32_0 : i32, i32
  }
  func.func @transform_3(%arg0: i32, %arg1: i32) -> (i32, i32, i32) {
    %c0_i32 = arith.constant 0 : i32
    %c0_i32_0 = arith.constant 0 : i32
    return %arg1, %arg0, %c0_i32 : i32, i32, i32
  }
  func.func @transform_4(%arg0: i32, %arg1: i32) -> (i32, i32, i32) {
    %c0_i32 = arith.constant 0 : i32
    %c0_i32_0 = arith.constant 0 : i32
    return %arg1, %arg0, %c0_i32 : i32, i32, i32
  }
}

</mosaic_0001>

<llo_original>
// kernel: tpu_custom_call.1
$region0: #{tpu_custom_call.1}
  #allocation0 [shape = 'u32[]', space=smem, size = 0x4, offset = 0x4, fixed_abs, tag = 'smem constant byte address 0x4 - core index']
  #allocation1 [shape = 'u32[144,128]{1,0:T(1,128)}', space=vmem, size = 0x12000, scoped, tag = 'internal scratch']
  #allocation2 [shape = 'f32[16,128]{1,0:T(8,128)}', space=vmem, size = 0x2000, scoped, tag = 'scratch operand']
  %s0 = inlined_call_operand.hbm [shape: f32[1,16,128], index: 0, kind: input, shape index: {}]
  %s1 = inlined_call_operand.hbm [shape: f32[16,128], index: 1, kind: input, shape index: {}]
  %s2 = inlined_call_operand.hbm [shape: f32[128,128], index: 2, kind: input, shape index: {}]
  %s3 = inlined_call_operand.hbm [shape: f32[1,16,128], index: 3, kind: output, shape index: {0}]
  %s4 = inlined_call_operand.hbm [shape: f32[1,16,128], index: 4, kind: output, shape index: {1}]
  %5 = xla_tuple %s3, %s4
  %s6 = sld [smem:[#allocation0]]
  $region46: #{tpu_custom_call.1} parent=0
    _
  %s8 = ssub.s32 1, %s6
  %s9 = scalar_select 0, %s8, %s6
  $region1: #{tpu_custom_call.1} parent=0
    #allocation3 [shape = 'u8[8192]{0}', space=vmem, size = 0x2000, scoped, tag = 'input window, operand 0, single buffered']
    #allocation4 [shape = 's32[1]{0}', space=sflag, size = 0x4, scoped, tag = 'scoped memory for tpu_custom_call.1']
    #allocation5 [shape = 's32[1]{0}', space=sflag, size = 0x4, scoped, tag = 'scoped memory for tpu_custom_call.1']
    #allocation6 [shape = 'u8[8192]{0}', space=vmem, size = 0x2000, scoped, tag = 'input window, operand 1, single buffered']
    #allocation7 [shape = 's32[1]{0}', space=sflag, size = 0x4, scoped, tag = 'scoped memory for tpu_custom_call.1']
    #allocation8 [shape = 'u8[65536]{0}', space=vmem, size = 0x10000, scoped, tag = 'input window, operand 2, single buffered']
    #allocation9 [shape = 'u8[8192]{0}', space=vmem, size = 0x2000, scoped, tag = 'output window, operand 0, single buffered']
    #allocation10 [shape = 'u8[8192]{0}', space=vmem, size = 0x2000, scoped, tag = 'output window, operand 1, single buffered']
    #allocation11 [shape = 's32[1]{0}', space=sflag, size = 0x4, scoped, tag = 'scoped memory for tpu_custom_call.1']
    %10 = vsyncpa [#allocation4], 0
    %11 = vsyncpa [#allocation7], 0
    %12 = vsyncpa [#allocation5], 0
    %13 = vsyncpa [#allocation11], 0
    // Predicated region
    $region2: #{tpu_custom_call.1} parent=1 // pred_check
      _
    $region3: #{tpu_custom_call.1} parent=1 // pred_check_branch
      %15 = sbr.rel (0) target = $region5
    $region4: #{tpu_custom_call.1} parent=1 // pred_region
      %s17 = ssub.s32 256, 256
      %18 = vsyncadd [#allocation4], %s17
      %s19 = sshll.u32 [#allocation3], 4
      %s20 = int_to_ptr.vmem [resolvable:$true] %s19
      %25 = dma.hbm_to_vmem [thread:$0]  %s0, 256, %s20, [#allocation4], 128, 128, 8
    $region5: #{tpu_custom_call.1} parent=1 // pred_fallthru
      _
    // Predicated region
    $region6: #{tpu_custom_call.1} parent=1 // pred_check
      _
    $region7: #{tpu_custom_call.1} parent=1 // pred_check_branch
      %27 = sbr.rel (0) target = $region9
    $region8: #{tpu_custom_call.1} parent=1 // pred_region
      %s29 = ssub.s32 256, 256
      %30 = vsyncadd [#allocation7], %s29
      %s31 = sshll.u32 [#allocation6], 4
      %s32 = int_to_ptr.vmem [resolvable:$true] %s31
      %37 = dma.hbm_to_vmem [thread:$0]  %s1, 256, %s32, [#allocation7], 128, 128, 8
    $region9: #{tpu_custom_call.1} parent=1 // pred_fallthru
      _
    // Predicated region
    $region10: #{tpu_custom_call.1} parent=1 // pred_check
      _
    $region11: #{tpu_custom_call.1} parent=1 // pred_check_branch
      %39 = sbr.rel (0) target = $region13
    $region12: #{tpu_custom_call.1} parent=1 // pred_region
      %s41 = ssub.s32 2048, 2048
      %42 = vsyncadd [#allocation7], %s41
      %s43 = sshll.u32 [#allocation8], 4
      %s44 = int_to_ptr.vmem [resolvable:$true] %s43
      %49 = dma.hbm_to_vmem [thread:$0]  %s2, 2048, %s44, [#allocation7], 128, 128, 8
    $region13: #{tpu_custom_call.1} parent=1 // pred_fallthru
      _
    // Predicated region
    $region14: #{tpu_custom_call.1} parent=1 // pred_check
      _
    $region15: #{tpu_custom_call.1} parent=1 // pred_check_branch
      %51 = sbr.rel (0) target = $region17
    $region16: #{tpu_custom_call.1} parent=1 // pred_region
      %52 = dma.done [#allocation4], 256
    $region17: #{tpu_custom_call.1} parent=1 // pred_fallthru
      _
    // Predicated region
    $region18: #{tpu_custom_call.1} parent=1 // pred_check
      _
    $region19: #{tpu_custom_call.1} parent=1 // pred_check_branch
      %54 = sbr.rel (0) target = $region21
    $region20: #{tpu_custom_call.1} parent=1 // pred_region
      %55 = dma.done [#allocation7], 256
    $region21: #{tpu_custom_call.1} parent=1 // pred_fallthru
      _
    // Predicated region
    $region22: #{tpu_custom_call.1} parent=1 // pred_check
      _
    $region23: #{tpu_custom_call.1} parent=1 // pred_check_branch
      %57 = sbr.rel (0) target = $region25
    $region24: #{tpu_custom_call.1} parent=1 // pred_region
      %58 = dma.done [#allocation7], 2048
    $region25: #{tpu_custom_call.1} parent=1 // pred_fallthru
      _
    %p59 = scmp.eq.s32.totalorder 0, 0
    // Predicated region
    $region26: #{tpu_custom_call.1} parent=1 // pred_check
      %p60 = pneg %p59
    $region27: #{tpu_custom_call.1} parent=1 // pred_check_branch
      %62 = sbr.rel (%p60) target = $region29
    $region28: #{tpu_custom_call.1} parent=1 // pred_region
      %v63 = vld [vmem:[#allocation6] sm:$0xff]
      %v64 = vld [vmem:[#allocation6 + $0x8] sm:$0xff]
      %65 = vst [vmem:[#allocation2] sm:$0xff] %v63
      %66 = vst [vmem:[#allocation2 + $0x8] sm:$0xff] %v64
    $region29: #{tpu_custom_call.1} parent=1 // pred_fallthru
      _
    %v67 = vld [vmem:[#allocation8] sm:$0xff]
    %v68 = vld [vmem:[#allocation8 + $0x8] sm:$0xff]
    %v69 = vld [vmem:[#allocation8 + $0x10] sm:$0xff]
    %v70 = vld [vmem:[#allocation8 + $0x18] sm:$0xff]
    %v71 = vld [vmem:[#allocation8 + $0x20] sm:$0xff]
    %v72 = vld [vmem:[#allocation8 + $0x28] sm:$0xff]
    %v73 = vld [vmem:[#allocation8 + $0x30] sm:$0xff]
    %v74 = vld [vmem:[#allocation8 + $0x38] sm:$0xff]
    %v75 = vld [vmem:[#allocation8 + $0x40] sm:$0xff]
    %v76 = vld [vmem:[#allocation8 + $0x48] sm:$0xff]
    %v77 = vld [vmem:[#allocation8 + $0x50] sm:$0xff]
    %v78 = vld [vmem:[#allocation8 + $0x58] sm:$0xff]
    %v79 = vld [vmem:[#allocation8 + $0x60] sm:$0xff]
    %v80 = vld [vmem:[#allocation8 + $0x68] sm:$0xff]
    %v81 = vld [vmem:[#allocation8 + $0x70] sm:$0xff]
    %v82 = vld [vmem:[#allocation8 + $0x78] sm:$0xff]
    %v83 = vld [vmem:[#allocation2] sm:$0xff]
    %v84 = vld [vmem:[#allocation2 + $0x8] sm:$0xff]
    %v85 = vld [vmem:[#allocation3] sm:$0xff]
    %v86 = vld [vmem:[#allocation3 + $0x8] sm:$0xff]
    %87 = vmatprep.subr.mxu0 0.0
    %88 = vmatpush1.msra.mxu0 %v67
    %89 = vmatprep.subr.mxu0 0.0
    %90 = vmatpush1.msra.mxu0 %v68
    %91 = vmatprep.subr.mxu0 0.0
    %92 = vmatpush1.msra.mxu0 %v69
    %93 = vmatprep.subr.mxu0 0.0
    %94 = vmatpush1.msra.mxu0 %v70
    %95 = vmatprep.subr.mxu0 0.0
    %96 = vmatpush1.msra.mxu0 %v71
    %97 = vmatprep.subr.mxu0 0.0
    %98 = vmatpush1.msra.mxu0 %v72
    %99 = vmatprep.subr.mxu0 0.0
    %100 = vmatpush1.msra.mxu0 %v73
    %101 = vmatprep.subr.mxu0 0.0
    %102 = vmatpush1.msra.mxu0 %v74
    %103 = vmatprep.subr.mxu0 0.0
    %104 = vmatpush1.msra.mxu0 %v75
    %105 = vmatprep.subr.mxu0 0.0
    %106 = vmatpush1.msra.mxu0 %v76
    %107 = vmatprep.subr.mxu0 0.0
    %108 = vmatpush1.msra.mxu0 %v77
    %109 = vmatprep.subr.mxu0 0.0
    %110 = vmatpush1.msra.mxu0 %v78
    %111 = vmatprep.subr.mxu0 0.0
    %112 = vmatpush1.msra.mxu0 %v79
    %113 = vmatprep.subr.mxu0 0.0
    %114 = vmatpush1.msra.mxu0 %v80
    %115 = vmatprep.subr.mxu0 0.0
    %116 = vmatpush1.msra.mxu0 %v81
    %117 = vmatprep.subr.mxu0 0.0
    %118 = vmatpush1.msra.mxu0 %v82
    %119 = vmatprep.subr.mxu0 0.0
    %120 = vmatpush1.msra.mxu0 0.0
    %121 = vmatprep.subr.mxu0 0.0
    %122 = vmatpush1.msra.mxu0 0.0
    %123 = vmatprep.subr.mxu0 0.0
    %124 = vmatpush1.msra.mxu0 0.0
    %125 = vmatprep.subr.mxu0 0.0
    %126 = vmatpush1.msra.mxu0 0.0
    %127 = vmatprep.subr.mxu0 0.0
    %128 = vmatpush1.msra.mxu0 0.0
    %129 = vmatprep.subr.mxu0 0.0
    %130 = vmatpush1.msra.mxu0 0.0
    %131 = vmatprep.subr.mxu0 0.0
    %132 = vmatpush1.msra.mxu0 0.0
    %133 = vmatprep.subr.mxu0 0.0
    %134 = vmatpush1.msra.mxu0 0.0
    %135 = vmatprep.subr.mxu0 0.0
    %136 = vmatpush1.msra.mxu0 0.0
    %137 = vmatprep.subr.mxu0 0.0
    %138 = vmatpush1.msra.mxu0 0.0
    %139 = vmatprep.subr.mxu0 0.0
    %140 = vmatpush1.msra.mxu0 0.0
    %141 = vmatprep.subr.mxu0 0.0
    %142 = vmatpush1.msra.mxu0 0.0
    %143 = vmatprep.subr.mxu0 0.0
    %144 = vmatpush1.msra.mxu0 0.0
    %145 = vmatprep.subr.mxu0 0.0
    %146 = vmatpush1.msra.mxu0 0.0
    %147 = vmatprep.subr.mxu0 0.0
    %148 = vmatpush1.msra.mxu0 0.0
    %149 = vmatprep.subr.mxu0 0.0
    %150 = vmatpush1.msra.mxu0 0.0
    %151 = vmatprep.mubr.f32.mxu0 0.0
    %152 = vmatmul.mubr.f32.gmra.mrb[0].mxu0 %v83
    %v153 = vpop.f32.mrb[0].mxu0
    %v154 = vadd.f32 %v85, %v153
    %v155 = vpop.f32.mrb[0].mxu0
    %156 = vmatprep.mubr.f32.mxu0 0.0
    %157 = vmatmul.mubr.f32.gmra.mrb[0].mxu0 %v84
    %v158 = vpop.f32.mrb[0].mxu0
    %v159 = vadd.f32 %v86, %v158
    %v160 = vpop.f32.mrb[0].mxu0
    %161 = vdwg.mxu0
    %162 = vst [vmem:[#allocation10] sm:$0xff] %v154
    %163 = vst [vmem:[#allocation10 + $0x8] sm:$0xff] %v159
    %v164 = vtanh.pop %v154
    %v165 = vtanh.pop %v159
    %166 = vst [vmem:[#allocation9] sm:$0xff] %v164
    %167 = vst [vmem:[#allocation9 + $0x8] sm:$0xff] %v165
    %168 = vst [vmem:[#allocation2] sm:$0xff] %v164
    %169 = vst [vmem:[#allocation2 + $0x8] sm:$0xff] %v165
    // Predicated region
    $region30: #{tpu_custom_call.1} parent=1 // pred_check
      _
    $region31: #{tpu_custom_call.1} parent=1 // pred_check_branch
      %171 = sbr.rel (0) target = $region33
    $region32: #{tpu_custom_call.1} parent=1 // pred_region
      %s173 = ssub.s32 256, 256
      %174 = vsyncadd [#allocation5], %s173
      %s175 = sshll.u32 [#allocation9], 4
      %s176 = int_to_ptr.vmem [resolvable:$true] %s175
      %181 = dma.vmem_to_hbm [thread:$0]  %s176, 256, %s3, [#allocation5], 128, 128, 8
    $region33: #{tpu_custom_call.1} parent=1 // pred_fallthru
      _
    // Predicated region
    $region34: #{tpu_custom_call.1} parent=1 // pred_check
      _
    $region35: #{tpu_custom_call.1} parent=1 // pred_check_branch
      %183 = sbr.rel (0) target = $region37
    $region36: #{tpu_custom_call.1} parent=1 // pred_region
      %s185 = ssub.s32 256, 256
      %186 = vsyncadd [#allocation11], %s185
      %s187 = sshll.u32 [#allocation10], 4
      %s188 = int_to_ptr.vmem [resolvable:$true] %s187
      %193 = dma.vmem_to_hbm [thread:$0]  %s188, 256, %s4, [#allocation11], 128, 128, 8
    $region37: #{tpu_custom_call.1} parent=1 // pred_fallthru
      _
    // Predicated region
    $region38: #{tpu_custom_call.1} parent=1 // pred_check
      _
    $region39: #{tpu_custom_call.1} parent=1 // pred_check_branch
      %195 = sbr.rel (0) target = $region41
    $region40: #{tpu_custom_call.1} parent=1 // pred_region
      %196 = dma.done [#allocation5], 256
    $region41: #{tpu_custom_call.1} parent=1 // pred_fallthru
      _
    // Predicated region
    $region42: #{tpu_custom_call.1} parent=1 // pred_check
      _
    $region43: #{tpu_custom_call.1} parent=1 // pred_check_branch
      %198 = sbr.rel (0) target = $region45
    $region44: #{tpu_custom_call.1} parent=1 // pred_region
      %199 = dma.done [#allocation11], 256
    $region45: #{tpu_custom_call.1} parent=1 // pred_fallthru
      _
    %200 = vsyncpa [#allocation4], 1
    %201 = vsyncpa [#allocation7], 1
    %202 = vsyncpa [#allocation5], 1
    %203 = vsyncpa [#allocation11], 1

</llo_original>
